<compile_context>
chip_gen: v6e
topology: v6e:2x2x1
jax: 0.10.0
libtpu: 0.0.40
codegen_flags: <defaults>
</compile_context>

<pallas_src>
import functools

import jax
import jax.numpy as jnp
from jax import lax
from jax.experimental import pallas as pl
from jax.experimental.pallas import tpu as pltpu


def _round_up(x, m):
    return ((x + m - 1) // m) * m


def _linear_kernel(x_ref, w_ref, b_ref, o_ref, acc_ref):
    """Computes one (tm, tn) output tile; K is the innermost ("arbitrary") axis."""
    k = pl.program_id(2)

    @pl.when(k == 0)
    def _init():
        acc_ref[...] = jnp.zeros_like(acc_ref)

    # Weight kept in torch layout (tn, tk); contract dim 1 of both operands so
    # the MXU handles the transposed operand directly.
    acc_ref[...] += lax.dot_general(
        x_ref[...], w_ref[...],
        dimension_numbers=(((1,), (1,)), ((), ())),
        preferred_element_type=jnp.float32,
    )

    @pl.when(k == pl.num_programs(2) - 1)
    def _finalize():
        # Bias add once per output tile, on the f32 accumulator (v5e-friendly),
        # then a single lane-dense cast+store.
        o_ref[...] = (acc_ref[...] + b_ref[...].astype(jnp.float32)).astype(o_ref.dtype)


def prepare_params(weight, bias):
    """One-time (init-time) parameter prep.

    Pads the output-feature dim up to a multiple of 128 (lane-dense output)
    while KEEPING torch layout (D_out, D_in) — no transpose anywhere.
    """
    d_out, _ = weight.shape
    n_pad = _round_up(d_out, 128)
    if n_pad != d_out:
        weight = jnp.pad(weight, ((0, n_pad - d_out), (0, 0)))
        bias = jnp.pad(bias, (0, n_pad - d_out))
    return weight, bias.reshape(1, n_pad)


@functools.partial(jax.jit, static_argnames=("d_out", "tm_max", "tn_max", "tk_max"))
def linear_forward(x, w_padded, b_padded, *, d_out, tm_max=128, tn_max=256, tk_max=256):
    """x: (B, D_in); w_padded: (N, D_in) torch layout, N % 128 == 0; b_padded: (1, N)."""
    B, D_in = x.shape
    N, K_w = w_padded.shape
    assert N % 128 == 0 and b_padded.shape == (1, N)
    assert K_w == D_in

    # ---- M (batch) tiling: rows padded to a sublane multiple of 8 ----
    tm = min(tm_max, _round_up(B, 8))
    M = _round_up(B, tm)

    # ---- N (output features) tiling: N is already a multiple of 128 ----
    tn = min(tn_max, N)
    if N % tn != 0:
        tn = 128

    # ---- K (reduction) tiling ----
    if D_in <= tk_max:
        tk, K = D_in, D_in          # single K pass; full-dim block is legal
    else:
        tk = tk_max
        K = _round_up(D_in, tk)

    # Pad activations/weight only when needed (no-op at the demo shape).
    if (M, K) != (B, D_in):
        x = jnp.pad(x, ((0, M - B), (0, K - D_in)))
    if K != K_w:
        w_padded = jnp.pad(w_padded, ((0, 0), (0, K - K_w)))

    grid = (M // tm, N // tn, K // tk)

    # VMEM budget: double-buffered x/w/bias/out tiles + f32 accumulator,
    # with headroom, clamped under v7x's 64 MiB physical VMEM.
    bpe = x.dtype.itemsize
    need = 2 * (tm * tk + tn * tk + tn) * bpe + 2 * tm * tn * bpe + tm * tn * 4
    vmem_limit = int(min(max(4 * need, 4 << 20), 60 << 20))

    out = pl.pallas_call(
        _linear_kernel,
        out_shape=jax.ShapeDtypeStruct((M, N), x.dtype),
        grid_spec=pltpu.PrefetchScalarGridSpec(
            num_scalar_prefetch=0,
            grid=grid,
            in_specs=[
                pl.BlockSpec((tm, tk), lambda i, j, k: (i, k)),   # activations
                pl.BlockSpec((tn, tk), lambda i, j, k: (j, k)),   # weight (torch layout)
                pl.BlockSpec((1, tn), lambda i, j, k: (0, j)),    # bias row
            ],
            out_specs=pl.BlockSpec((tm, tn), lambda i, j, k: (i, j)),
            scratch_shapes=[pltpu.VMEM((tm, tn), jnp.float32)],
        ),
        compiler_params=pltpu.CompilerParams(
            dimension_semantics=("parallel", "parallel", "arbitrary"),
            vmem_limit_bytes=vmem_limit,
        ),
    )(x, w_padded, b_padded)

    # Slice away the lane/row padding (cheap XLA slice).
    return out[:B, :d_out]


if __name__ == "__main__":
    # Small shapes consistent with the module: input_dim=32, output_dim=16, batch=8.
    batch, input_dim, output_dim = 8, 32, 16

    key = jax.random.PRNGKey(0)
    kx, kw, kb = jax.random.split(key, 3)

    x = jax.random.normal(kx, (batch, input_dim), dtype=jnp.float32)
    # Deterministic init mimicking nn.Linear's uniform(-1/sqrt(fan_in), 1/sqrt(fan_in)).
    bound = 1.0 / jnp.sqrt(jnp.float32(input_dim))
    weight = jax.random.uniform(kw, (output_dim, input_dim),
                                minval=-bound, maxval=bound, dtype=jnp.float32)
    bias = jax.random.uniform(kb, (output_dim,),
                              minval=-bound, maxval=bound, dtype=jnp.float32)

    # One-time parameter prep (lane-dense padding of the output dim, torch layout kept).
    w_p, b_p = prepare_params(weight, bias)

    out = linear_forward(x, w_p, b_p, d_out=output_dim)
    out = jax.block_until_ready(out)

    # Correctness check against plain-JAX reference of torch semantics.
    ref = x @ weight.T + bias
    assert out.shape == (batch, output_dim)
    assert jnp.allclose(out, ref, atol=1e-5, rtol=1e-5)

    print("KERNEL_OK")
</pallas_src>

<mosaic_0001>
module attributes {stable_mosaic.version = 11 : i64} {
  func.func @_linear_kernel(%arg0: i32, %arg1: i32, %arg2: i32, %arg3: memref<8x32xf32, #tpu.memory_space<vmem>>, %arg4: memref<128x32xf32, #tpu.memory_space<vmem>>, %arg5: memref<1x128xf32, #tpu.memory_space<vmem>>, %arg6: memref<8x128xf32, #tpu.memory_space<vmem>>, %arg7: memref<8x128xf32, #tpu.memory_space<vmem>>) attributes {dimension_semantics = [#tpu.dimension_semantics<parallel>, #tpu.dimension_semantics<parallel>, #tpu.dimension_semantics<arbitrary>], iteration_bounds = array<i64: 1, 1, 1>, scalar_prefetch = 0 : i64, scratch_operands = 1 : i64, tpu.core_type = #tpu.core_type<tc>, window_params = [{transform_indices = @transform_0, window_bounds = array<i64: 8, 32>}, {transform_indices = @transform_1, window_bounds = array<i64: 128, 32>}, {transform_indices = @transform_2, window_bounds = array<i64: 1, 128>}, {transform_indices = @transform_3, window_bounds = array<i64: 8, 128>}]} {
    %c0_i32 = arith.constant 0 : i32
    %0 = arith.cmpi eq, %arg2, %c0_i32 : i32
    %1 = arith.extui %0 : i1 to i32
    %c0_i32_0 = arith.constant 0 : i32
    %2 = arith.cmpi ne, %1, %c0_i32_0 : i32
    scf.if %2 {
      %cst_10 = arith.constant 0.000000e+00 : f32
      %12 = vector.broadcast %cst_10 : f32 to vector<8x128xf32>
      %c0_11 = arith.constant 0 : index
      %c0_12 = arith.constant 0 : index
      %13 = vector.load %arg7[%c0_11, %c0_12] : memref<8x128xf32, #tpu.memory_space<vmem>>, vector<8x128xf32>
      tpu.vector_store %arg7[%c0_11, %c0_12], %12 {strides = array<i32>} : memref<8x128xf32, #tpu.memory_space<vmem>>, vector<8x128xf32>,
    } else {
    }
    %c0 = arith.constant 0 : index
    %c0_1 = arith.constant 0 : index
    %3 = vector.load %arg7[%c0, %c0_1] : memref<8x128xf32, #tpu.memory_space<vmem>>, vector<8x128xf32>
    %c0_2 = arith.constant 0 : index
    %c0_3 = arith.constant 0 : index
    %4 = vector.load %arg3[%c0_2, %c0_3] : memref<8x32xf32, #tpu.memory_space<vmem>>, vector<8x32xf32>
    %c0_4 = arith.constant 0 : index
    %c0_5 = arith.constant 0 : index
    %5 = vector.load %arg4[%c0_4, %c0_5] : memref<128x32xf32, #tpu.memory_space<vmem>>, vector<128x32xf32>
    %cst = arith.constant dense<0.000000e+00> : vector<8x128xf32>
    %6 = tpu.matmul %4, %5, %cst {dimension_numbers = #tpu.dot_dimension_numbers<[1], [1], [0], [0], [0, 0, 1, 0], [], []>} : vector<8x32xf32>, vector<128x32xf32>, vector<8x128xf32> -> vector<8x128xf32>
    %7 = arith.addf %3, %6 : vector<8x128xf32>
    %c0_6 = arith.constant 0 : index
    %c0_7 = arith.constant 0 : index
    %8 = vector.load %arg7[%c0_6, %c0_7] : memref<8x128xf32, #tpu.memory_space<vmem>>, vector<8x128xf32>
    tpu.vector_store %arg7[%c0_6, %c0_7], %7 {strides = array<i32>} : memref<8x128xf32, #tpu.memory_space<vmem>>, vector<8x128xf32>,
    %c0_i32_8 = arith.constant 0 : i32
    %9 = arith.cmpi eq, %arg2, %c0_i32_8 : i32
    %10 = arith.extui %9 : i1 to i32
    %c0_i32_9 = arith.constant 0 : i32
    %11 = arith.cmpi ne, %10, %c0_i32_9 : i32
    scf.if %11 {
      %c0_10 = arith.constant 0 : index
      %c0_11 = arith.constant 0 : index
      %12 = vector.load %arg7[%c0_10, %c0_11] : memref<8x128xf32, #tpu.memory_space<vmem>>, vector<8x128xf32>
      %c0_12 = arith.constant 0 : index
      %c0_13 = arith.constant 0 : index
      %13 = vector.load %arg5[%c0_12, %c0_13] : memref<1x128xf32, #tpu.memory_space<vmem>>, vector<1x128xf32>
      %14 = vector.broadcast %13 : vector<1x128xf32> to vector<8x128xf32>
      %15 = arith.addf %12, %14 : vector<8x128xf32>
      %c0_14 = arith.constant 0 : index
      %c0_15 = arith.constant 0 : index
      %16 = vector.load %arg6[%c0_14, %c0_15] : memref<8x128xf32, #tpu.memory_space<vmem>>, vector<8x128xf32>
      tpu.vector_store %arg6[%c0_14, %c0_15], %15 {strides = array<i32>} : memref<8x128xf32, #tpu.memory_space<vmem>>, vector<8x128xf32>,
    } else {
    }
    return
  }
  func.func @transform_0(%arg0: i32, %arg1: i32, %arg2: i32) -> (i32, i32) {
    %c0_i32 = arith.constant 0 : i32
    return %arg0, %arg2 : i32, i32
  }
  func.func @transform_1(%arg0: i32, %arg1: i32, %arg2: i32) -> (i32, i32) {
    %c0_i32 = arith.constant 0 : i32
    return %arg1, %arg2 : i32, i32
  }
  func.func @transform_2(%arg0: i32, %arg1: i32, %arg2: i32) -> (i32, i32) {
    %c0_i32 = arith.constant 0 : i32
    %c0_i32_0 = arith.constant 0 : i32
    return %c0_i32, %arg1 : i32, i32
  }
  func.func @transform_3(%arg0: i32, %arg1: i32, %arg2: i32) -> (i32, i32) {
    %c0_i32 = arith.constant 0 : i32
    return %arg0, %arg1 : i32, i32
  }
}

</mosaic_0001>

<llo_original>
// kernel: linear_forward.1
$region0: #{linear_forward.1}
  #allocation0 [shape = 'u32[]', space=smem, size = 0x4, offset = 0x4, fixed_abs, tag = 'smem constant byte address 0x4 - core index']
  #allocation1 [shape = 'u32[144,128]{1,0:T(1,128)}', space=vmem, size = 0x12000, scoped, tag = 'internal scratch']
  #allocation2 [shape = 'f32[8,128]{1,0:T(8,128)}', space=vmem, size = 0x1000, scoped, tag = 'scratch operand']
  %s0 = inlined_call_operand.vmem [shape: f32[8,32], index: 0, kind: input, shape index: {}]
  %s1 = inlined_call_operand.vmem [shape: f32[128,32], index: 1, kind: input, shape index: {}]
  %s2 = inlined_call_operand.vmem [shape: f32[1,128], index: 2, kind: input, shape index: {}]
  %s3 = inlined_call_operand.hbm [shape: f32[8,128], index: 3, kind: output, shape index: {}]
  %s4 = sld [smem:[#allocation0]]
  $region30: #{linear_forward.1} parent=0
    _
  %s6 = ssub.s32 1, %s4
  %s7 = scalar_select 0, %s6, %s4
  $region1: #{linear_forward.1} parent=0
    #allocation3 [shape = 'u8[4096]{0}', space=vmem, size = 0x1000, scoped, tag = 'output window, operand 0, single buffered']
    #allocation4 [shape = 's32[1]{0}', space=sflag, size = 0x4, scoped, tag = 'scoped memory for linear_forward.1']
    %8 = vsyncpa [#allocation4], 0
    // Predicated region
    $region2: #{linear_forward.1} parent=1 // pred_check
      _
    $region3: #{linear_forward.1} parent=1 // pred_check_branch
      %10 = sbr.rel (0) target = $region5
    $region4: #{linear_forward.1} parent=1 // pred_region
      _
    $region5: #{linear_forward.1} parent=1 // pred_fallthru
      _
    // Predicated region
    $region6: #{linear_forward.1} parent=1 // pred_check
      _
    $region7: #{linear_forward.1} parent=1 // pred_check_branch
      %12 = sbr.rel (0) target = $region9
    $region8: #{linear_forward.1} parent=1 // pred_region
      _
    $region9: #{linear_forward.1} parent=1 // pred_fallthru
      _
    // Predicated region
    $region10: #{linear_forward.1} parent=1 // pred_check
      _
    $region11: #{linear_forward.1} parent=1 // pred_check_branch
      %14 = sbr.rel (0) target = $region13
    $region12: #{linear_forward.1} parent=1 // pred_region
      _
    $region13: #{linear_forward.1} parent=1 // pred_fallthru
      _
    %p15 = scmp.eq.s32.totalorder 0, 0
    // Predicated region
    $region14: #{linear_forward.1} parent=1 // pred_check
      %p16 = pneg %p15
    $region15: #{linear_forward.1} parent=1 // pred_check_branch
      %18 = sbr.rel (%p16) target = $region17
    $region16: #{linear_forward.1} parent=1 // pred_region
      %19 = vst [vmem:[#allocation2] sm:$0xff] 0.0
    $region17: #{linear_forward.1} parent=1 // pred_fallthru
      _
    %v20 = vld [vmem:[#allocation2] sm:$0xff]
    %v21 = vld [vmem:[%s0] sm:$0xff]
    %v22 = vld [vmem:[%s1] sm:$0xff]
    %v23 = vld [vmem:[%s1 + $0x8] sm:$0xff]
    %v24 = vld [vmem:[%s1 + $0x10] sm:$0xff]
    %v25 = vld [vmem:[%s1 + $0x18] sm:$0xff]
    %v26 = vld [vmem:[%s1 + $0x20] sm:$0xff]
    %v27 = vld [vmem:[%s1 + $0x28] sm:$0xff]
    %v28 = vld [vmem:[%s1 + $0x30] sm:$0xff]
    %v29 = vld [vmem:[%s1 + $0x38] sm:$0xff]
    %v30 = vld [vmem:[%s1 + $0x40] sm:$0xff]
    %v31 = vld [vmem:[%s1 + $0x48] sm:$0xff]
    %v32 = vld [vmem:[%s1 + $0x50] sm:$0xff]
    %v33 = vld [vmem:[%s1 + $0x58] sm:$0xff]
    %v34 = vld [vmem:[%s1 + $0x60] sm:$0xff]
    %v35 = vld [vmem:[%s1 + $0x68] sm:$0xff]
    %v36 = vld [vmem:[%s1 + $0x70] sm:$0xff]
    %v37 = vld [vmem:[%s1 + $0x78] sm:$0xff]
    %vm38 = vcmask 261120
    %v40 = vsel %vm38, %v21, 0
    %v43 = vsel %vm38, %v22, 0
    %v46 = vsel %vm38, %v23, 0
    %v49 = vsel %vm38, %v24, 0
    %v52 = vsel %vm38, %v25, 0
    %v55 = vsel %vm38, %v26, 0
    %v58 = vsel %vm38, %v27, 0
    %v61 = vsel %vm38, %v28, 0
    %v64 = vsel %vm38, %v29, 0
    %v67 = vsel %vm38, %v30, 0
    %v70 = vsel %vm38, %v31, 0
    %v73 = vsel %vm38, %v32, 0
    %v76 = vsel %vm38, %v33, 0
    %v79 = vsel %vm38, %v34, 0
    %v82 = vsel %vm38, %v35, 0
    %v85 = vsel %vm38, %v36, 0
    %v88 = vsel %vm38, %v37, 0
    %90 = vmatprep.subr.mxu0 0.0
    %91 = vmatpush1.xpose.msra.mxu0 %v88
    %92 = vmatprep.subr.mxu0 0.0
    %93 = vmatpush1.xpose.msra.mxu0 %v85
    %94 = vmatprep.subr.mxu0 0.0
    %95 = vmatpush1.xpose.msra.mxu0 %v82
    %96 = vmatprep.subr.mxu0 0.0
    %97 = vmatpush1.xpose.msra.mxu0 %v79
    %98 = vmatprep.subr.mxu0 0.0
    %99 = vmatpush1.xpose.msra.mxu0 %v76
    %100 = vmatprep.subr.mxu0 0.0
    %101 = vmatpush1.xpose.msra.mxu0 %v73
    %102 = vmatprep.subr.mxu0 0.0
    %103 = vmatpush1.xpose.msra.mxu0 %v70
    %104 = vmatprep.subr.mxu0 0.0
    %105 = vmatpush1.xpose.msra.mxu0 %v67
    %106 = vmatprep.subr.mxu0 0.0
    %107 = vmatpush1.xpose.msra.mxu0 %v64
    %108 = vmatprep.subr.mxu0 0.0
    %109 = vmatpush1.xpose.msra.mxu0 %v61
    %110 = vmatprep.subr.mxu0 0.0
    %111 = vmatpush1.xpose.msra.mxu0 %v58
    %112 = vmatprep.subr.mxu0 0.0
    %113 = vmatpush1.xpose.msra.mxu0 %v55
    %114 = vmatprep.subr.mxu0 0.0
    %115 = vmatpush1.xpose.msra.mxu0 %v52
    %116 = vmatprep.subr.mxu0 0.0
    %117 = vmatpush1.xpose.msra.mxu0 %v49
    %118 = vmatprep.subr.mxu0 0.0
    %119 = vmatpush1.xpose.msra.mxu0 %v46
    %120 = vmatprep.subr.mxu0 0.0
    %121 = vmatpush1.xpose.msra.mxu0 %v43
    %122 = vmatprep.subr.mxu0 0.0
    %123 = vmatpush2.xpose.msra.mxu0 0.0
    %124 = vmatprep.subr.mxu0 0.0
    %125 = vmatpush2.xpose.msra.mxu0 0.0
    %126 = vmatprep.subr.mxu0 0.0
    %127 = vmatpush2.xpose.msra.mxu0 0.0
    %128 = vmatprep.subr.mxu0 0.0
    %129 = vmatpush2.xpose.msra.mxu0 0.0
    %130 = vmatprep.subr.mxu0 0.0
    %131 = vmatpush2.xpose.msra.mxu0 0.0
    %132 = vmatprep.subr.mxu0 0.0
    %133 = vmatpush2.xpose.msra.mxu0 0.0
    %134 = vmatprep.subr.mxu0 0.0
    %135 = vmatpush2.xpose.msra.mxu0 0.0
    %136 = vmatprep.subr.mxu0 0.0
    %137 = vmatpush2.xpose.msra.mxu0 0.0
    %138 = vmatprep.subr.mxu0 0.0
    %139 = vmatpush2.xpose.msra.mxu0 0.0
    %140 = vmatprep.subr.mxu0 0.0
    %141 = vmatpush2.xpose.msra.mxu0 0.0
    %142 = vmatprep.subr.mxu0 0.0
    %143 = vmatpush2.xpose.msra.mxu0 0.0
    %144 = vmatprep.subr.mxu0 0.0
    %145 = vmatpush2.xpose.msra.mxu0 0.0
    %146 = vmatprep.subr.mxu0 0.0
    %147 = vmatpush2.xpose.msra.mxu0 0.0
    %148 = vmatprep.subr.mxu0 0.0
    %149 = vmatpush2.xpose.msra.mxu0 0.0
    %150 = vmatprep.subr.mxu0 0.0
    %151 = vmatpush2.xpose.msra.mxu0 0.0
    %152 = vmatprep.subr.mxu0 0.0
    %153 = vmatpush2.xpose.msra.mxu0 0.0
    %154 = vmatprep.mubr.f32.mxu0 0.0
    %155 = vmatmul.mubr.f32.gmra.mxu0 %v40
    %v156 = vpop.f32.mrf.mxu0
    %v157 = vadd.f32 0.0, %v156
    %v158 = vpop.f32.mrf.mxu0
    %159 = vdwg.mxu0
    %v160 = vadd.f32 %v20, %v157
    %161 = vst [vmem:[#allocation2] sm:$0xff] %v160
    // Predicated region
    $region18: #{linear_forward.1} parent=1 // pred_check
      %p162 = pneg %p15
    $region19: #{linear_forward.1} parent=1 // pred_check_branch
      %164 = sbr.rel (%p162) target = $region21
    $region20: #{linear_forward.1} parent=1 // pred_region
      %v165 = vld [vmem:[#allocation2] sm:$0xff]
      %v166 = vld [vmem:[%s2] sm:$0x1]
      %v168 = vlaneseq
      %v169 = vshrl.u32 %v168, 7
      %v170 = vsub.s32 0, %v169
      %v171 = vrot.slane %v166, %v170
      %v173 = vadd.f32 %v165, %v171
      %174 = vst [vmem:[#allocation3] sm:$0xff] %v173
    $region21: #{linear_forward.1} parent=1 // pred_fallthru
      _
    // Predicated region
    $region22: #{linear_forward.1} parent=1 // pred_check
      _
    $region23: #{linear_forward.1} parent=1 // pred_check_branch
      %176 = sbr.rel (0) target = $region25
    $region24: #{linear_forward.1} parent=1 // pred_region
      %s178 = ssub.s32 128, 128
      %179 = vsyncadd [#allocation4], %s178
      %s181 = sshll.u32 [#allocation3], 4
      %s182 = int_to_ptr.vmem [resolvable:$true] %s181
      %184 = dma.vmem_to_hbm [thread:$0]  %s182, 128, %s3, [#allocation4]
    $region25: #{linear_forward.1} parent=1 // pred_fallthru
      _
    // Predicated region
    $region26: #{linear_forward.1} parent=1 // pred_check
      _
    $region27: #{linear_forward.1} parent=1 // pred_check_branch
      %186 = sbr.rel (0) target = $region29
    $region28: #{linear_forward.1} parent=1 // pred_region
      %187 = dma.done [#allocation4], 128
    $region29: #{linear_forward.1} parent=1 // pred_fallthru
      _
    %188 = vsyncpa [#allocation4], 1

</llo_original>
